<compile_context>
chip_gen: v7x
topology: tpu7x:2x2x1
jax: 0.10.0
libtpu: 0.0.40
codegen_flags: <defaults>
</compile_context>

<pallas_src>
import math

import jax
import jax.numpy as jnp
from jax.experimental import pallas as pl
from jax.experimental.pallas import tpu as pltpu

LANE = 128
SUBLANE = 8
MAX_BLOCK_ROWS = 512          # 512 rows * 128 lanes = 65536 boxes/block (~2 MiB input)
PI = math.pi
INV_PI = 1.0 / math.pi
EPS = 1e-6


def _iou3d_nearest_kernel(boxes_ref, loss_ref):
    """boxes_ref: (2, 8, TR, 128) f32 = (pred/target, box params, rows, lanes).
       loss_ref : (TR, 128) f32 per-box loss (1 - IoU)."""

    def nearest_bev_corners(s):
        # Every slice below is a dense (TR, 128) tile -> full vreg utilization.
        x = boxes_ref[s, 0]
        y = boxes_ref[s, 1]
        dx = boxes_ref[s, 3]
        dy = boxes_ref[s, 4]
        yaw = boxes_ref[s, 6]
        # limit_period(yaw, offset=0.5, period=pi), then abs -> rot in [0, pi/2]
        rot = jnp.abs(yaw - jnp.floor(yaw * INV_PI + 0.5) * PI)
        cond = rot > (PI * 0.25)
        # swap dx/dy when the normalized rotation exceeds pi/4
        w = jnp.where(cond, dy, dx)
        h = jnp.where(cond, dx, dy)
        hw = 0.5 * w
        hh = 0.5 * h
        return x - hw, y - hh, x + hw, y + hh

    px1, py1, px2, py2 = nearest_bev_corners(0)
    tx1, ty1, tx2, ty2 = nearest_bev_corners(1)

    # aligned 2D IoU (mode='iou', eps=1e-6)
    ow = jnp.maximum(jnp.minimum(px2, tx2) - jnp.maximum(px1, tx1), 0.0)
    oh = jnp.maximum(jnp.minimum(py2, ty2) - jnp.maximum(py1, ty1), 0.0)
    overlap = ow * oh
    area1 = (px2 - px1) * (py2 - py1)
    area2 = (tx2 - tx1) * (ty2 - ty1)
    union = jnp.maximum(area1 + area2 - overlap, EPS)
    # union >= eps > 0, so the approx EUP reciprocal is safe (off the VALU slot).
    iou = overlap * pl.reciprocal(union, approx=True)
    loss_ref[...] = 1.0 - iou


def _per_box_iou3d_loss(pred2d, tgt2d):
    """pred2d / tgt2d: (N, 7) float32 -> per-box loss (N,) float32."""
    n = pred2d.shape[0]
    if n == 0:
        return jnp.zeros((0,), jnp.float32)

    # rows needed, rounded up to a multiple of the sublane count (8)
    n_rows_min = max(1, -(-n // LANE))
    n_rows_min = -(-n_rows_min // SUBLANE) * SUBLANE

    if n_rows_min <= MAX_BLOCK_ROWS:
        # Single grid step: whole padded array is one block (typical small-N case).
        tr = n_rows_min
        n_rows = n_rows_min
    else:
        tr = MAX_BLOCK_ROWS
        n_rows = -(-n_rows_min // tr) * tr
    n_pad = n_rows * LANE
    grid = (n_rows // tr,)

    # Pack pred + target into a single channel-major (2, 8, n_rows, 128) slab so
    # every per-parameter kernel slice is a dense, (8, 128)-aligned tile.
    # TODO(synk): if the producer can supply channel-major (7, N) boxes directly,
    # this pad + transpose (one extra HBM pass over the box data) can be dropped.
    boxes = jnp.stack([pred2d, tgt2d], axis=0)                    # (2, N, 7)
    boxes = jnp.pad(boxes, ((0, 0), (0, n_pad - n), (0, 1)))      # (2, n_pad, 8)
    boxes = boxes.transpose(0, 2, 1).reshape(2, 8, n_rows, LANE)  # (2, 8, rows, 128)

    loss_tiles = pl.pallas_call(
        _iou3d_nearest_kernel,
        out_shape=jax.ShapeDtypeStruct((n_rows, LANE), jnp.float32),
        grid_spec=pltpu.PrefetchScalarGridSpec(
            num_scalar_prefetch=0,
            grid=grid,
            in_specs=[pl.BlockSpec((2, 8, tr, LANE), lambda i: (0, 0, i, 0))],
            out_specs=pl.BlockSpec((tr, LANE), lambda i: (i, 0)),
        ),
        compiler_params=pltpu.CompilerParams(
            dimension_semantics=("parallel",),
        ),
    )(boxes)

    return loss_tiles.reshape(-1)[:n]


class IoU3DLoss:
    """JAX/Pallas port of mmdet3d-plugin IoU3DLoss (no learnable params)."""

    def __init__(self, reduction='mean', loss_weight=1.0):
        assert reduction in ('none', 'mean', 'sum')
        self.reduction = reduction
        self.loss_weight = loss_weight

    def __call__(self, pred, target, weight=None, avg_factor=None,
                 reduction_override=None):
        assert reduction_override in (None, 'none', 'mean', 'sum')
        reduction = reduction_override if reduction_override else self.reduction

        pred = jnp.asarray(pred)
        target = jnp.asarray(target)

        weight_full = None
        if weight is not None:
            weight = jnp.asarray(weight)
            weight_full = weight
            if weight.ndim > 1:
                weight = weight.mean(-1)

        lead_shape = pred.shape[:-1]
        pred2 = pred.reshape(-1, 7).astype(jnp.float32)
        tgt2 = target.reshape(-1, 7).astype(jnp.float32)

        loss = _per_box_iou3d_loss(pred2, tgt2).reshape(lead_shape)

        # weight_reduce_loss semantics
        if weight is not None:
            loss = loss * weight
        if avg_factor is None:
            if reduction == 'mean':
                loss = loss.mean()
            elif reduction == 'sum':
                loss = loss.sum()
        else:
            if reduction == 'mean':
                loss = loss.sum() / avg_factor
            elif reduction != 'none':
                raise ValueError('avg_factor can only be used with reduction="mean"')

        loss = self.loss_weight * loss

        if weight_full is not None:
            # jit-safe replacement for the torch early exit
            #   if not torch.any(weight > 0): return pred.sum() * weight.sum()
            # (values match: all-zero weights make both paths zero; for
            #  reduction='none' the elementwise shape is kept for jit stability).
            degenerate = (pred.sum() * weight_full.sum()).astype(loss.dtype)
            loss = jnp.where(jnp.any(weight_full > 0), loss, degenerate)
        return loss


if __name__ == "__main__":
    key = jax.random.PRNGKey(0)
    kp, kt = jax.random.split(key)

    def make_boxes(k, n):
        ka, kb, kc = jax.random.split(k, 3)
        centers = jax.random.uniform(ka, (n, 3), minval=-5.0, maxval=5.0)
        dims = jax.random.uniform(kb, (n, 3), minval=0.5, maxval=3.0)
        yaw = jax.random.uniform(kc, (n, 1), minval=-3.14, maxval=3.14)
        return jnp.concatenate([centers, dims, yaw], axis=-1)

    n_boxes = 8
    pred = make_boxes(kp, n_boxes)                       # (8, 7)
    # targets = slightly perturbed preds so IoU is non-trivial
    target = pred + 0.2 * jax.random.normal(kt, pred.shape)

    loss_fn = IoU3DLoss(reduction='mean', loss_weight=1.0)
    loss = loss_fn(pred, target)
    jax.block_until_ready(loss)

    # 'none' reduction path
    loss_none = loss_fn(pred, target, reduction_override='none')
    jax.block_until_ready(loss_none)

    # weighted path under jit (exercises the jit-safe zero-weight handling)
    weight = jnp.ones((n_boxes,), jnp.float32)
    loss_w = jax.jit(lambda p, t, w: loss_fn(p, t, weight=w))(pred, target, weight)
    jax.block_until_ready(loss_w)

    print("KERNEL_OK")
</pallas_src>

<mosaic_0001>
module attributes {stable_mosaic.version = 11 : i64} {
  func.func @_iou3d_nearest_kernel(%arg0: i32, %arg1: memref<2x8x8x128xf32, #tpu.memory_space<vmem>>, %arg2: memref<8x128xf32, #tpu.memory_space<vmem>>) attributes {dimension_semantics = [#tpu.dimension_semantics<parallel>], iteration_bounds = array<i64: 1>, scalar_prefetch = 0 : i64, scratch_operands = 0 : i64, tpu.core_type = #tpu.core_type<tc>, window_params = [{transform_indices = @transform_0, window_bounds = array<i64: 2, 8, 8, 128>}, {transform_indices = @transform_1, window_bounds = array<i64: 8, 128>}]} {
    %c0 = arith.constant 0 : index
    %c0_0 = arith.constant 0 : index
    %c0_1 = arith.constant 0 : index
    %c0_2 = arith.constant 0 : index
    %0 = vector.load %arg1[%c0, %c0_0, %c0_1, %c0_2] : memref<2x8x8x128xf32, #tpu.memory_space<vmem>>, vector<1x1x8x128xf32>
    %1 = vector.shape_cast %0 : vector<1x1x8x128xf32> to vector<8x128xf32>
    %c0_3 = arith.constant 0 : index
    %c1 = arith.constant 1 : index
    %c0_4 = arith.constant 0 : index
    %c0_5 = arith.constant 0 : index
    %2 = vector.load %arg1[%c0_3, %c1, %c0_4, %c0_5] : memref<2x8x8x128xf32, #tpu.memory_space<vmem>>, vector<1x1x8x128xf32>
    %3 = vector.shape_cast %2 : vector<1x1x8x128xf32> to vector<8x128xf32>
    %c0_6 = arith.constant 0 : index
    %c3 = arith.constant 3 : index
    %c0_7 = arith.constant 0 : index
    %c0_8 = arith.constant 0 : index
    %4 = vector.load %arg1[%c0_6, %c3, %c0_7, %c0_8] : memref<2x8x8x128xf32, #tpu.memory_space<vmem>>, vector<1x1x8x128xf32>
    %5 = vector.shape_cast %4 : vector<1x1x8x128xf32> to vector<8x128xf32>
    %c0_9 = arith.constant 0 : index
    %c4 = arith.constant 4 : index
    %c0_10 = arith.constant 0 : index
    %c0_11 = arith.constant 0 : index
    %6 = vector.load %arg1[%c0_9, %c4, %c0_10, %c0_11] : memref<2x8x8x128xf32, #tpu.memory_space<vmem>>, vector<1x1x8x128xf32>
    %7 = vector.shape_cast %6 : vector<1x1x8x128xf32> to vector<8x128xf32>
    %c0_12 = arith.constant 0 : index
    %c6 = arith.constant 6 : index
    %c0_13 = arith.constant 0 : index
    %c0_14 = arith.constant 0 : index
    %8 = vector.load %arg1[%c0_12, %c6, %c0_13, %c0_14] : memref<2x8x8x128xf32, #tpu.memory_space<vmem>>, vector<1x1x8x128xf32>
    %9 = vector.shape_cast %8 : vector<1x1x8x128xf32> to vector<8x128xf32>
    %cst = arith.constant 0.318309873 : f32
    %10 = vector.broadcast %cst : f32 to vector<8x128xf32>
    %11 = arith.mulf %9, %10 : vector<8x128xf32>
    %cst_15 = arith.constant 5.000000e-01 : f32
    %12 = vector.broadcast %cst_15 : f32 to vector<8x128xf32>
    %13 = arith.addf %11, %12 : vector<8x128xf32>
    %14 = math.floor %13 : vector<8x128xf32>
    %cst_16 = arith.constant 3.14159274 : f32
    %15 = vector.broadcast %cst_16 : f32 to vector<8x128xf32>
    %16 = arith.mulf %14, %15 : vector<8x128xf32>
    %17 = arith.subf %9, %16 : vector<8x128xf32>
    %18 = math.absf %17 : vector<8x128xf32>
    %cst_17 = arith.constant 0.785398185 : f32
    %19 = vector.broadcast %cst_17 : f32 to vector<8x128xf32>
    %20 = arith.cmpf ogt, %18, %19 : vector<8x128xf32>
    %21 = arith.select %20, %7, %5 : vector<8x128xi1>, vector<8x128xf32>
    %22 = arith.select %20, %5, %7 : vector<8x128xi1>, vector<8x128xf32>
    %cst_18 = arith.constant 5.000000e-01 : f32
    %23 = vector.broadcast %cst_18 : f32 to vector<8x128xf32>
    %24 = arith.mulf %23, %21 : vector<8x128xf32>
    %cst_19 = arith.constant 5.000000e-01 : f32
    %25 = vector.broadcast %cst_19 : f32 to vector<8x128xf32>
    %26 = arith.mulf %25, %22 : vector<8x128xf32>
    %27 = arith.subf %1, %24 : vector<8x128xf32>
    %28 = arith.subf %3, %26 : vector<8x128xf32>
    %29 = arith.addf %1, %24 : vector<8x128xf32>
    %30 = arith.addf %3, %26 : vector<8x128xf32>
    %c1_20 = arith.constant 1 : index
    %c0_21 = arith.constant 0 : index
    %c0_22 = arith.constant 0 : index
    %c0_23 = arith.constant 0 : index
    %31 = vector.load %arg1[%c1_20, %c0_21, %c0_22, %c0_23] : memref<2x8x8x128xf32, #tpu.memory_space<vmem>>, vector<1x1x8x128xf32>
    %32 = vector.shape_cast %31 : vector<1x1x8x128xf32> to vector<8x128xf32>
    %c1_24 = arith.constant 1 : index
    %c1_25 = arith.constant 1 : index
    %c0_26 = arith.constant 0 : index
    %c0_27 = arith.constant 0 : index
    %33 = vector.load %arg1[%c1_24, %c1_25, %c0_26, %c0_27] : memref<2x8x8x128xf32, #tpu.memory_space<vmem>>, vector<1x1x8x128xf32>
    %34 = vector.shape_cast %33 : vector<1x1x8x128xf32> to vector<8x128xf32>
    %c1_28 = arith.constant 1 : index
    %c3_29 = arith.constant 3 : index
    %c0_30 = arith.constant 0 : index
    %c0_31 = arith.constant 0 : index
    %35 = vector.load %arg1[%c1_28, %c3_29, %c0_30, %c0_31] : memref<2x8x8x128xf32, #tpu.memory_space<vmem>>, vector<1x1x8x128xf32>
    %36 = vector.shape_cast %35 : vector<1x1x8x128xf32> to vector<8x128xf32>
    %c1_32 = arith.constant 1 : index
    %c4_33 = arith.constant 4 : index
    %c0_34 = arith.constant 0 : index
    %c0_35 = arith.constant 0 : index
    %37 = vector.load %arg1[%c1_32, %c4_33, %c0_34, %c0_35] : memref<2x8x8x128xf32, #tpu.memory_space<vmem>>, vector<1x1x8x128xf32>
    %38 = vector.shape_cast %37 : vector<1x1x8x128xf32> to vector<8x128xf32>
    %c1_36 = arith.constant 1 : index
    %c6_37 = arith.constant 6 : index
    %c0_38 = arith.constant 0 : index
    %c0_39 = arith.constant 0 : index
    %39 = vector.load %arg1[%c1_36, %c6_37, %c0_38, %c0_39] : memref<2x8x8x128xf32, #tpu.memory_space<vmem>>, vector<1x1x8x128xf32>
    %40 = vector.shape_cast %39 : vector<1x1x8x128xf32> to vector<8x128xf32>
    %cst_40 = arith.constant 0.318309873 : f32
    %41 = vector.broadcast %cst_40 : f32 to vector<8x128xf32>
    %42 = arith.mulf %40, %41 : vector<8x128xf32>
    %cst_41 = arith.constant 5.000000e-01 : f32
    %43 = vector.broadcast %cst_41 : f32 to vector<8x128xf32>
    %44 = arith.addf %42, %43 : vector<8x128xf32>
    %45 = math.floor %44 : vector<8x128xf32>
    %cst_42 = arith.constant 3.14159274 : f32
    %46 = vector.broadcast %cst_42 : f32 to vector<8x128xf32>
    %47 = arith.mulf %45, %46 : vector<8x128xf32>
    %48 = arith.subf %40, %47 : vector<8x128xf32>
    %49 = math.absf %48 : vector<8x128xf32>
    %cst_43 = arith.constant 0.785398185 : f32
    %50 = vector.broadcast %cst_43 : f32 to vector<8x128xf32>
    %51 = arith.cmpf ogt, %49, %50 : vector<8x128xf32>
    %52 = arith.select %51, %38, %36 : vector<8x128xi1>, vector<8x128xf32>
    %53 = arith.select %51, %36, %38 : vector<8x128xi1>, vector<8x128xf32>
    %cst_44 = arith.constant 5.000000e-01 : f32
    %54 = vector.broadcast %cst_44 : f32 to vector<8x128xf32>
    %55 = arith.mulf %54, %52 : vector<8x128xf32>
    %cst_45 = arith.constant 5.000000e-01 : f32
    %56 = vector.broadcast %cst_45 : f32 to vector<8x128xf32>
    %57 = arith.mulf %56, %53 : vector<8x128xf32>
    %58 = arith.subf %32, %55 : vector<8x128xf32>
    %59 = arith.subf %34, %57 : vector<8x128xf32>
    %60 = arith.addf %32, %55 : vector<8x128xf32>
    %61 = arith.addf %34, %57 : vector<8x128xf32>
    %62 = arith.minimumf %29, %60 : vector<8x128xf32>
    %63 = arith.maximumf %27, %58 : vector<8x128xf32>
    %64 = arith.subf %62, %63 : vector<8x128xf32>
    %cst_46 = arith.constant 0.000000e+00 : f32
    %65 = vector.broadcast %cst_46 : f32 to vector<8x128xf32>
    %66 = arith.maximumf %64, %65 : vector<8x128xf32>
    %67 = arith.minimumf %30, %61 : vector<8x128xf32>
    %68 = arith.maximumf %28, %59 : vector<8x128xf32>
    %69 = arith.subf %67, %68 : vector<8x128xf32>
    %cst_47 = arith.constant 0.000000e+00 : f32
    %70 = vector.broadcast %cst_47 : f32 to vector<8x128xf32>
    %71 = arith.maximumf %69, %70 : vector<8x128xf32>
    %72 = arith.mulf %66, %71 : vector<8x128xf32>
    %73 = arith.subf %29, %27 : vector<8x128xf32>
    %74 = arith.subf %30, %28 : vector<8x128xf32>
    %75 = arith.mulf %73, %74 : vector<8x128xf32>
    %76 = arith.subf %60, %58 : vector<8x128xf32>
    %77 = arith.subf %61, %59 : vector<8x128xf32>
    %78 = arith.mulf %76, %77 : vector<8x128xf32>
    %79 = arith.addf %75, %78 : vector<8x128xf32>
    %80 = arith.subf %79, %72 : vector<8x128xf32>
    %cst_48 = arith.constant 9.99999997E-7 : f32
    %81 = vector.broadcast %cst_48 : f32 to vector<8x128xf32>
    %82 = arith.maximumf %80, %81 : vector<8x128xf32>
    %83 = tpu.reciprocal %82 {approx = true} : vector<8x128xf32> -> vector<8x128xf32>
    %84 = arith.mulf %72, %83 : vector<8x128xf32>
    %cst_49 = arith.constant 1.000000e+00 : f32
    %85 = vector.broadcast %cst_49 : f32 to vector<8x128xf32>
    %86 = arith.subf %85, %84 : vector<8x128xf32>
    %c0_50 = arith.constant 0 : index
    %c0_51 = arith.constant 0 : index
    %87 = vector.load %arg2[%c0_50, %c0_51] : memref<8x128xf32, #tpu.memory_space<vmem>>, vector<8x128xf32>
    tpu.vector_store %arg2[%c0_50, %c0_51], %86 {strides = array<i32>} : memref<8x128xf32, #tpu.memory_space<vmem>>, vector<8x128xf32>,
    return
  }
  func.func @transform_0(%arg0: i32) -> (i32, i32, i32, i32) {
    %c0_i32 = arith.constant 0 : i32
    %c0_i32_0 = arith.constant 0 : i32
    %c0_i32_1 = arith.constant 0 : i32
    %c0_i32_2 = arith.constant 0 : i32
    return %c0_i32, %c0_i32_0, %arg0, %c0_i32_1 : i32, i32, i32, i32
  }
  func.func @transform_1(%arg0: i32) -> (i32, i32) {
    %c0_i32 = arith.constant 0 : i32
    %c0_i32_0 = arith.constant 0 : i32
    return %arg0, %c0_i32 : i32, i32
  }
}

</mosaic_0001>

<llo_original>
// kernel: tpu_custom_call.1
$region0: #{tpu_custom_call.1}
  #allocation0 [shape = 'u32[]', space=smem, size = 0x4, offset = 0x4, fixed_abs, tag = 'smem constant byte address 0x4 - core index']
  #allocation1 [shape = 'u32[144,128]{1,0:T(1,128)}', space=vmem, size = 0x12000, scoped, tag = 'internal scratch']
  %s0 = inlined_call_operand.hbm [shape: f32[2,8,8,128], index: 0, kind: input, shape index: {}]
  %s1 = inlined_call_operand.hbm [shape: f32[8,128], index: 1, kind: output, shape index: {}]
  %s2 = sld [smem:[#allocation0]]
  $region18: #{tpu_custom_call.1} parent=0
    _
  %s4 = ssub.s32 1, %s2
  %s5 = scalar_select 0, %s4, %s2
  $region1: #{tpu_custom_call.1} parent=0
    #allocation2 [shape = 'u8[65536]{0}', space=vmem, size = 0x10000, scoped, tag = 'input window, operand 0, single buffered']
    #allocation3 [shape = 's32[1]{0}', space=sflag, size = 0x4, scoped, tag = 'scoped memory for tpu_custom_call.1']
    #allocation4 [shape = 's32[1]{0}', space=sflag, size = 0x4, scoped, tag = 'scoped memory for tpu_custom_call.1']
    #allocation5 [shape = 'u8[4096]{0}', space=vmem, size = 0x1000, scoped, tag = 'output window, operand 0, single buffered']
    %6 = vsyncpa [#allocation3], 0
    %7 = vsyncpa [#allocation4], 0
    // Predicated region
    $region2: #{tpu_custom_call.1} parent=1 // pred_check
      _
    $region3: #{tpu_custom_call.1} parent=1 // pred_check_branch
      %9 = sbr.rel (0) target = $region5
    $region4: #{tpu_custom_call.1} parent=1 // pred_region
      %s11 = ssub.s32 2048, 2048
      %12 = vsyncadd [#allocation3], %s11
      %s13 = sshll.u32 [#allocation2], 4
      %s14 = int_to_ptr.vmem [resolvable:$true] %s13
      %19 = dma.hbm_to_vmem [thread:$0]  %s0, 2048, %s14, [#allocation3], 128, 128, 8
    $region5: #{tpu_custom_call.1} parent=1 // pred_fallthru
      _
    // Predicated region
    $region6: #{tpu_custom_call.1} parent=1 // pred_check
      _
    $region7: #{tpu_custom_call.1} parent=1 // pred_check_branch
      %21 = sbr.rel (0) target = $region9
    $region8: #{tpu_custom_call.1} parent=1 // pred_region
      %22 = dma.done [#allocation3], 2048
    $region9: #{tpu_custom_call.1} parent=1 // pred_fallthru
      _
    %v23 = vld [vmem:[#allocation2] sm:$0xff]
    %s24 = scalar_lea.vmem [#allocation2], 8
    %v25 = vld [vmem:[%s24] sm:$0xff]
    %s26 = scalar_lea.vmem [#allocation2], 24
    %v27 = vld [vmem:[%s26] sm:$0xff]
    %s28 = scalar_lea.vmem [#allocation2], 32
    %v29 = vld [vmem:[%s28] sm:$0xff]
    %s30 = scalar_lea.vmem [#allocation2], 48
    %v31 = vld [vmem:[%s30] sm:$0xff]
    %v32 = vmul.f32 %v31, 0.31830987
    %v33 = vadd.f32 %v32, 0.5
    %v34 = vfloor.f32 %v33
    %v35 = vmul.f32 %v34, 3.1415927
    %v36 = vsub.f32 %v31, %v35
    %v37 = vand.u32 2147483647, %v36
    %vm38 = vcmp.gt.f32.partialorder %v37, 0.7853982
    %v39 = vsel %vm38, %v29, %v27
    %v40 = vsel %vm38, %v27, %v29
    %v41 = vmul.f32 %v39, 0.5
    %v42 = vmul.f32 %v40, 0.5
    %v43 = vsub.f32 %v23, %v41
    %v44 = vsub.f32 %v25, %v42
    %v45 = vadd.f32 %v23, %v41
    %v46 = vadd.f32 %v25, %v42
    %s47 = scalar_lea.vmem [#allocation2], 64
    %v48 = vld [vmem:[%s47] sm:$0xff]
    %s49 = scalar_lea.vmem [#allocation2], 72
    %v50 = vld [vmem:[%s49] sm:$0xff]
    %s51 = scalar_lea.vmem [#allocation2], 88
    %v52 = vld [vmem:[%s51] sm:$0xff]
    %s53 = scalar_lea.vmem [#allocation2], 96
    %v54 = vld [vmem:[%s53] sm:$0xff]
    %s55 = scalar_lea.vmem [#allocation2], 112
    %v56 = vld [vmem:[%s55] sm:$0xff]
    %v57 = vmul.f32 %v56, 0.31830987
    %v58 = vadd.f32 %v57, 0.5
    %v59 = vfloor.f32 %v58
    %v60 = vmul.f32 %v59, 3.1415927
    %v61 = vsub.f32 %v56, %v60
    %v62 = vand.u32 2147483647, %v61
    %vm63 = vcmp.gt.f32.partialorder %v62, 0.7853982
    %v64 = vsel %vm63, %v54, %v52
    %v65 = vsel %vm63, %v52, %v54
    %v66 = vmul.f32 %v64, 0.5
    %v67 = vmul.f32 %v65, 0.5
    %v68 = vsub.f32 %v48, %v66
    %v69 = vsub.f32 %v50, %v67
    %v70 = vadd.f32 %v48, %v66
    %v71 = vadd.f32 %v50, %v67
    %v72 = vmin.f32 %v45, %v70
    %v73 = vmax.f32 %v43, %v68
    %v74 = vsub.f32 %v72, %v73
    %v75 = vmax.f32 %v74, 0.0
    %v76 = vmin.f32 %v46, %v71
    %v77 = vmax.f32 %v44, %v69
    %v78 = vsub.f32 %v76, %v77
    %v79 = vmax.f32 %v78, 0.0
    %v80 = vmul.f32 %v75, %v79
    %v81 = vsub.f32 %v45, %v43
    %v82 = vsub.f32 %v46, %v44
    %v83 = vmul.f32 %v81, %v82
    %v84 = vsub.f32 %v70, %v68
    %v85 = vsub.f32 %v71, %v69
    %v86 = vmul.f32 %v84, %v85
    %v87 = vadd.f32 %v83, %v86
    %v88 = vsub.f32 %v87, %v80
    %v89 = vmax.f32 %v88, 1e-06
    %v90 = vrcp.pop %v89
    %v91 = vmul.f32 %v80, %v90
    %v92 = vsub.f32 1.0, %v91
    %93 = vst [vmem:[#allocation5] sm:$0xff] %v92
    // Predicated region
    $region10: #{tpu_custom_call.1} parent=1 // pred_check
      _
    $region11: #{tpu_custom_call.1} parent=1 // pred_check_branch
      %95 = sbr.rel (0) target = $region13
    $region12: #{tpu_custom_call.1} parent=1 // pred_region
      %s97 = ssub.s32 128, 128
      %98 = vsyncadd [#allocation4], %s97
      %s100 = sshll.u32 [#allocation5], 4
      %s101 = int_to_ptr.vmem [resolvable:$true] %s100
      %103 = dma.vmem_to_hbm [thread:$0]  %s101, 128, %s1, [#allocation4]
    $region13: #{tpu_custom_call.1} parent=1 // pred_fallthru
      _
    // Predicated region
    $region14: #{tpu_custom_call.1} parent=1 // pred_check
      _
    $region15: #{tpu_custom_call.1} parent=1 // pred_check_branch
      %105 = sbr.rel (0) target = $region17
    $region16: #{tpu_custom_call.1} parent=1 // pred_region
      %106 = dma.done [#allocation4], 128
    $region17: #{tpu_custom_call.1} parent=1 // pred_fallthru
      _
    %107 = vsyncpa [#allocation3], 1
    %108 = vsyncpa [#allocation4], 1

</llo_original>
